<compile_context>
chip_gen: v5e
topology: v5e:2x2
jax: 0.10.0
libtpu: 0.0.40
codegen_flags: <defaults>
</compile_context>

<pallas_src>
import math

import jax
import jax.numpy as jnp
from jax.experimental import pallas as pl
from jax.experimental.pallas import tpu as pltpu


def _fold_factor(H, W):
    """Smallest divisor k of H making k*W a multiple of 128 lanes.

    Falls back to the smallest divisor with k*W >= 128, then to k = H."""
    best_ge = None
    for d in range(1, H + 1):
        if H % d:
            continue
        if (d * W) % 128 == 0:
            return d
        if best_ge is None and d * W >= 128:
            best_ge = d
    return best_ge if best_ge is not None else H


def _planes_per_block(P, Hk, plane_work_bytes, sub_mult, target_bytes):
    """Planes per block: largest tb with tb*Hk a sublane multiple, the block
    under the VMEM target, and >= 2 grid steps when P >= 2 (v7x has 2 TCs)."""
    m = sub_mult // math.gcd(Hk, sub_mult)        # tb must be a multiple of m
    ub = max(1, target_bytes // max(1, plane_work_bytes))
    if P >= 2:
        ub = min(ub, (P + 1) // 2)                # keep at least 2 blocks
    ub = min(ub, P)
    tb = (ub // m) * m
    if tb == 0:
        # Sublane multiple not reachable under the target: smallest legal block.
        # TODO(synk): huge planes with Hk not sublane-chunkable still produce
        # oversized blocks here (very rare shapes).
        tb = P if P <= m else m
    return tb


def _make_plane_block_kernel(W, L, Hk, BR, R, ragged):
    """TV partial sums for a block of whole image planes (BR = planes*Hk rows)."""

    def kernel(y_ref, out_ref):
        x = y_ref[...].astype(jnp.float32)                        # (BR, L)
        lane = jax.lax.broadcasted_iota(jnp.int32, (1, L), 1)     # (1, L)
        row = jax.lax.broadcasted_iota(jnp.int32, (BR, 1), 0)     # (BR, 1)
        if ragged:
            # Tail block: zero rows past the real array so garbage reads vanish.
            x = jnp.where(pl.program_id(0) * BR + row < R, x, 0.0)

        # ---- width direction: |y[h, w] - y[h, w+1]| for w < W-1 ----
        wmask = (lane % W) != (W - 1)                             # (1, L)
        wnext = pltpu.roll(x, L - 1, axis=1)                      # x[r, (l+1) % L]
        wpart = jnp.where(wmask, jnp.abs(x - wnext), 0.0)

        # ---- height direction: |y[h, w] - y[h+1, w]| for h < H-1 ----
        if L == W:
            # No fold: the next image row is the next sublane.
            hnext = pltpu.roll(x, BR - 1, axis=0)                 # x[(r+1) % BR, l]
            hok = (row % Hk) != (Hk - 1)                          # (BR, 1)
            hpart = jnp.where(hok, jnp.abs(x - hnext), 0.0)
        elif Hk == 1:
            # Whole plane in one folded row: next image row is W lanes over.
            hnext = pltpu.roll(x, L - W, axis=1)                  # x[r, (l+W) % L]
            hpart = jnp.where(lane < (L - W), jnp.abs(x - hnext), 0.0)
        else:
            inrow = lane < (L - W)                                # (1, L)
            a = pltpu.roll(x, L - W, axis=1)                      # x[r,   (l+W) % L]
            b = pltpu.roll(a, BR - 1, axis=0)                     # x[r+1, (l+W) % L]
            hnext = jnp.where(inrow, a, b)
            hok = (row % Hk) != (Hk - 1)                          # not plane's last row
            hpart = jnp.where(jnp.logical_or(hok, inrow),
                              jnp.abs(x - hnext), 0.0)

        # Lane-dense partial (sublane reduce only); final reduce in wrapper.
        out_ref[...] = jnp.sum(wpart + hpart, axis=0, keepdims=True).reshape(1, 1, L)

    return kernel


def _make_plane_chunk_kernel(W, L, Hk, Hb):
    """TV partial sums for a chunk of Hb folded rows of one image plane.

    Cross-chunk height pairs (the chunk's last folded row) are masked here and
    added back by the wrapper's seam pass."""
    ragged = (Hk % Hb) != 0

    def kernel(y_ref, out_ref):
        x = y_ref[...].astype(jnp.float32)                        # (Hb, L)
        lane = jax.lax.broadcasted_iota(jnp.int32, (1, L), 1)     # (1, L)
        row = jax.lax.broadcasted_iota(jnp.int32, (Hb, 1), 0)     # (Hb, 1)
        gr = pl.program_id(1) * Hb + row                          # folded row within plane
        if ragged:
            x = jnp.where(gr < Hk, x, 0.0)

        wmask = (lane % W) != (W - 1)
        wnext = pltpu.roll(x, L - 1, axis=1)
        wpart = jnp.where(wmask, jnp.abs(x - wnext), 0.0)

        # Cross-row pairs dropped on (a) the plane's last folded row and
        # (b) the chunk's last folded row (seam, added back in the wrapper).
        cross_ok = jnp.logical_and(row != (Hb - 1), gr != (Hk - 1))   # (Hb, 1)
        if L == W:
            hnext = pltpu.roll(x, Hb - 1, axis=0)
            hpart = jnp.where(cross_ok, jnp.abs(x - hnext), 0.0)
        else:
            inrow = lane < (L - W)
            a = pltpu.roll(x, L - W, axis=1)
            b = pltpu.roll(a, Hb - 1, axis=0)
            hnext = jnp.where(inrow, a, b)
            hpart = jnp.where(jnp.logical_or(cross_ok, inrow),
                              jnp.abs(x - hnext), 0.0)

        out_ref[...] = jnp.sum(wpart + hpart, axis=0, keepdims=True)

    return kernel


def total_variation_loss(y, *, target_block_bytes=4 * 1024 * 1024):
    """Pallas TPU implementation of TotalVariationLoss.forward (NCHW input)."""
    N, C, H, W = y.shape
    P = N * C
    itemsize = jnp.dtype(y.dtype).itemsize
    sub_mult = max(8, 32 // itemsize)            # sublane multiple: f32 8, bf16 16, int8 32

    k = _fold_factor(H, W)
    Hk = H // k                                  # folded rows per plane
    L = k * W                                    # lane width of the folded view
    R = P * Hk                                   # total folded rows
    plane_work_bytes = Hk * L * 4                # f32 working-set of one plane

    total_elems = P * H * W
    cost = pl.CostEstimate(flops=16 * total_elems, transcendentals=0,
                           bytes_accessed=total_elems * itemsize)

    use_chunks = plane_work_bytes > target_block_bytes and Hk >= 2 * sub_mult

    if not use_chunks:
        # ---- Regime A: whole planes per block (tb need not divide P). ----
        tb = _planes_per_block(P, Hk, plane_work_bytes, sub_mult, target_block_bytes)
        BR = tb * Hk
        num_blocks = -(-P // tb)
        ragged = (P % tb) != 0
        block_work = BR * L * 4
        vmem_limit = int(min(48 << 20, max(16 << 20, 8 * block_work + (2 << 20))))
        # TODO(synk): for very small blocks, pipeline_mode=pl.Buffered(3) could
        # hide more DMA latency on v5e (skipped to keep the spec minimal).
        partials = pl.pallas_call(
            _make_plane_block_kernel(W, L, Hk, BR, R, ragged),
            out_shape=jax.ShapeDtypeStruct((num_blocks, 1, L), jnp.float32),
            grid_spec=pltpu.PrefetchScalarGridSpec(
                num_scalar_prefetch=0,
                grid=(num_blocks,),
                in_specs=[pl.BlockSpec((BR, L), lambda i: (i, 0))],
                out_specs=pl.BlockSpec((1, 1, L), lambda i: (i, 0, 0)),
            ),
            compiler_params=pltpu.CompilerParams(
                dimension_semantics=("parallel",),
                vmem_limit_bytes=vmem_limit),
            cost_estimate=cost,
        )(y.reshape(R, L))
        return jnp.sum(partials).astype(y.dtype)

    # ---- Regime B: plane exceeds the block target -> chunk folded rows. ----
    Hb = (target_block_bytes // (L * 4)) // sub_mult * sub_mult
    Hb = max(Hb, sub_mult)
    num_chunks = -(-Hk // Hb)
    block_work = Hb * L * 4
    vmem_limit = int(min(48 << 20, max(16 << 20, 8 * block_work + (2 << 20))))
    partials = pl.pallas_call(
        _make_plane_chunk_kernel(W, L, Hk, Hb),
        out_shape=jax.ShapeDtypeStruct((P, num_chunks, 1, L), jnp.float32),
        grid_spec=pltpu.PrefetchScalarGridSpec(
            num_scalar_prefetch=0,
            grid=(P, num_chunks),
            in_specs=[pl.BlockSpec((None, Hb, L), lambda p, c: (p, c, 0))],
            out_specs=pl.BlockSpec((None, None, 1, L), lambda p, c: (p, c, 0, 0)),
        ),
        compiler_params=pltpu.CompilerParams(
            dimension_semantics=("parallel", "parallel"),
            vmem_limit_bytes=vmem_limit),
        cost_estimate=cost,
    )(y.reshape(P, Hk, L))
    total = jnp.sum(partials)

    # Cross-chunk seams: |y[h, :] - y[h+1, :]| for the last original row of each
    # non-final chunk.  One image row per seam -> negligible, plain JAX.
    seam_gr = [(c + 1) * Hb - 1 for c in range(num_chunks - 1) if (c + 1) * Hb < Hk]
    if seam_gr:
        h_idx = jnp.asarray([g * k + (k - 1) for g in seam_gr], dtype=jnp.int32)
        a = y[:, :, h_idx, :].astype(jnp.float32)
        b = y[:, :, h_idx + 1, :].astype(jnp.float32)
        total = total + jnp.sum(jnp.abs(a - b))
    return total.astype(y.dtype)


def total_variation_loss_ref(y):
    # Pure-JAX reference mirroring the PyTorch forward.
    yf = y.astype(jnp.float32)
    dw = jnp.sum(jnp.abs(yf[:, :, :, :-1] - yf[:, :, :, 1:]))
    dh = jnp.sum(jnp.abs(yf[:, :, :-1, :] - yf[:, :, 1:, :]))
    return (dw + dh).astype(y.dtype)


if __name__ == "__main__":
    key = jax.random.PRNGKey(0)
    cases = [
        ((2, 4, 16, 16), dict()),                              # folded lane-dense, 2 plane blocks
        ((1, 2, 8, 128), dict()),                              # unfolded (L == W) path
        ((5, 1, 16, 16), dict()),                              # ragged plane count -> masked tail block
        ((1, 1, 128, 32), dict(target_block_bytes=4096)),      # H-chunked (regime B) with fold + seams
        ((1, 1, 72, 128), dict(target_block_bytes=16384)),     # H-chunked with ragged tail chunk
    ]
    for idx, (shape, kw) in enumerate(cases):
        key, sub = jax.random.split(key)
        x = jax.random.normal(sub, shape, dtype=jnp.float32)
        out = jax.block_until_ready(total_variation_loss(x, **kw))
        ref = total_variation_loss_ref(x)
        assert jnp.allclose(out, ref, rtol=5e-5, atol=1e-2), (idx, shape, out, ref)
    print("KERNEL_OK")
</pallas_src>

<mosaic_0001>
module attributes {stable_mosaic.version = 11 : i64} {
  func.func @kernel(%arg0: i32, %arg1: memref<8x128xf32, #tpu.memory_space<vmem>>, %arg2: memref<1x1x128xf32, #tpu.memory_space<vmem>>) attributes {dimension_semantics = [#tpu.dimension_semantics<parallel>], iteration_bounds = array<i64: 2>, scalar_prefetch = 0 : i64, scratch_operands = 0 : i64, tpu.core_type = #tpu.core_type<tc>, window_params = [{transform_indices = @transform_0, window_bounds = array<i64: 8, 128>}, {transform_indices = @transform_1, window_bounds = array<i64: 1, 1, 128>}]} {
    %c0 = arith.constant 0 : index
    %c0_0 = arith.constant 0 : index
    %0 = vector.load %arg1[%c0, %c0_0] : memref<8x128xf32, #tpu.memory_space<vmem>>, vector<8x128xf32>
    %1 = tpu.iota {dimensions = array<i32: 1>} : vector<1x128xi32>
    %2 = tpu.iota {dimensions = array<i32: 0>} : vector<8x1xi32>
    %c16_i32 = arith.constant 16 : i32
    %c0_i32 = arith.constant 0 : i32
    %3 = arith.cmpi eq, %c16_i32, %c0_i32 : i32
    %c1_i32 = arith.constant 1 : i32
    %4 = arith.select %3, %c1_i32, %c16_i32 : i32
    %5 = vector.broadcast %4 : i32 to vector<1x128xi32>
    %6 = arith.remsi %1, %5 : vector<1x128xi32>
    %c0_i32_1 = arith.constant 0 : i32
    %7 = vector.broadcast %c0_i32_1 : i32 to vector<1x128xi32>
    %8 = arith.cmpi ne, %6, %7 : vector<1x128xi32>
    %c0_i32_2 = arith.constant 0 : i32
    %9 = vector.broadcast %c0_i32_2 : i32 to vector<1x128xi32>
    %10 = arith.cmpi slt, %6, %9 : vector<1x128xi32>
    %c0_i32_3 = arith.constant 0 : i32
    %11 = arith.cmpi slt, %4, %c0_i32_3 : i32
    %12 = vector.broadcast %11 : i1 to vector<1x128xi1>
    %13 = vector.broadcast %12 : vector<1x128xi1> to vector<1x128xi1>
    %14 = arith.xori %10, %13 : vector<1x128xi1>
    %15 = arith.andi %14, %8 : vector<1x128xi1>
    %16 = vector.broadcast %4 : i32 to vector<1x128xi32>
    %17 = arith.addi %6, %16 : vector<1x128xi32>
    %18 = arith.select %15, %17, %6 : vector<1x128xi1>, vector<1x128xi32>
    %c15_i32 = arith.constant 15 : i32
    %19 = vector.broadcast %c15_i32 : i32 to vector<1x128xi32>
    %20 = arith.cmpi ne, %18, %19 : vector<1x128xi32>
    %c127_i32 = arith.constant 127 : i32
    %21 = tpu.dynamic_rotate %0 by %c127_i32 dim 1 : vector<8x128xf32>, i32 -> vector<8x128xf32>
    %22 = arith.subf %0, %21 : vector<8x128xf32>
    %23 = math.absf %22 : vector<8x128xf32>
    %cst = arith.constant 0.000000e+00 : f32
    %24 = vector.shape_cast %20 : vector<1x128xi1> to vector<1x128xi1>
    %25 = vector.broadcast %24 : vector<1x128xi1> to vector<8x128xi1>
    %26 = vector.broadcast %cst : f32 to vector<8x128xf32>
    %27 = arith.select %25, %23, %26 : vector<8x128xi1>, vector<8x128xf32>
    %c112_i32 = arith.constant 112 : i32
    %28 = vector.broadcast %c112_i32 : i32 to vector<1x128xi32>
    %29 = arith.cmpi slt, %1, %28 : vector<1x128xi32>
    %c112_i32_4 = arith.constant 112 : i32
    %30 = tpu.dynamic_rotate %0 by %c112_i32_4 dim 1 : vector<8x128xf32>, i32 -> vector<8x128xf32>
    %c7_i32 = arith.constant 7 : i32
    %31 = tpu.dynamic_rotate %30 by %c7_i32 dim 0 : vector<8x128xf32>, i32 -> vector<8x128xf32>
    %32 = vector.shape_cast %29 : vector<1x128xi1> to vector<1x128xi1>
    %33 = vector.broadcast %32 : vector<1x128xi1> to vector<8x128xi1>
    %34 = arith.select %33, %30, %31 : vector<8x128xi1>, vector<8x128xf32>
    %c2_i32 = arith.constant 2 : i32
    %c0_i32_5 = arith.constant 0 : i32
    %35 = arith.cmpi eq, %c2_i32, %c0_i32_5 : i32
    %c1_i32_6 = arith.constant 1 : i32
    %36 = arith.select %35, %c1_i32_6, %c2_i32 : i32
    %37 = vector.broadcast %36 : i32 to vector<8x1xi32>
    %38 = arith.remsi %2, %37 : vector<8x1xi32>
    %c0_i32_7 = arith.constant 0 : i32
    %39 = vector.broadcast %c0_i32_7 : i32 to vector<8x1xi32>
    %40 = arith.cmpi ne, %38, %39 : vector<8x1xi32>
    %c0_i32_8 = arith.constant 0 : i32
    %41 = vector.broadcast %c0_i32_8 : i32 to vector<8x1xi32>
    %42 = arith.cmpi slt, %38, %41 : vector<8x1xi32>
    %c0_i32_9 = arith.constant 0 : i32
    %43 = arith.cmpi slt, %36, %c0_i32_9 : i32
    %44 = vector.broadcast %43 : i1 to vector<8x1xi1>
    %45 = vector.broadcast %44 : vector<8x1xi1> to vector<8x1xi1>
    %46 = arith.xori %42, %45 : vector<8x1xi1>
    %47 = arith.andi %46, %40 : vector<8x1xi1>
    %48 = vector.broadcast %36 : i32 to vector<8x1xi32>
    %49 = arith.addi %38, %48 : vector<8x1xi32>
    %50 = arith.select %47, %49, %38 : vector<8x1xi1>, vector<8x1xi32>
    %c1_i32_10 = arith.constant 1 : i32
    %51 = vector.broadcast %c1_i32_10 : i32 to vector<8x1xi32>
    %52 = arith.cmpi ne, %50, %51 : vector<8x1xi32>
    %53 = vector.broadcast %52 : vector<8x1xi1> to vector<8x128xi1>
    %54 = vector.broadcast %29 : vector<1x128xi1> to vector<8x128xi1>
    %55 = arith.ori %53, %54 : vector<8x128xi1>
    %56 = arith.subf %0, %34 : vector<8x128xf32>
    %57 = math.absf %56 : vector<8x128xf32>
    %cst_11 = arith.constant 0.000000e+00 : f32
    %58 = vector.broadcast %cst_11 : f32 to vector<8x128xf32>
    %59 = arith.select %55, %57, %58 : vector<8x128xi1>, vector<8x128xf32>
    %60 = arith.addf %27, %59 : vector<8x128xf32>
    %cst_12 = arith.constant dense<0.000000e+00> : vector<128xf32>
    %61 = vector.multi_reduction <add>, %60, %cst_12 [0] : vector<8x128xf32> to vector<128xf32>
    %62 = vector.shape_cast %61 : vector<128xf32> to vector<1x128xf32>
    %63 = vector.shape_cast %62 : vector<1x128xf32> to vector<1x1x128xf32>
    %c0_13 = arith.constant 0 : index
    %c0_14 = arith.constant 0 : index
    %c0_15 = arith.constant 0 : index
    %64 = vector.load %arg2[%c0_13, %c0_14, %c0_15] : memref<1x1x128xf32, #tpu.memory_space<vmem>>, vector<1x1x128xf32>
    tpu.vector_store %arg2[%c0_13, %c0_14, %c0_15], %63 {strides = array<i32>} : memref<1x1x128xf32, #tpu.memory_space<vmem>>, vector<1x1x128xf32>,
    return
  }
  func.func @transform_0(%arg0: i32) -> (i32, i32) {
    %c0_i32 = arith.constant 0 : i32
    %c0_i32_0 = arith.constant 0 : i32
    return %arg0, %c0_i32 : i32, i32
  }
  func.func @transform_1(%arg0: i32) -> (i32, i32, i32) {
    %c0_i32 = arith.constant 0 : i32
    %c0_i32_0 = arith.constant 0 : i32
    %c0_i32_1 = arith.constant 0 : i32
    return %arg0, %c0_i32, %c0_i32_0 : i32, i32, i32
  }
}

</mosaic_0001>

<llo_original>
// kernel: tpu_custom_call.1
$region0: #{tpu_custom_call.1}
  #allocation0 [shape = 'u32[]', space=smem, size = 0x4, offset = 0x4, fixed_abs, tag = 'smem constant byte address 0x4 - core index']
  #allocation1 [shape = 'u32[72,128]{1,0:T(1,128)}', space=vmem, size = 0x9000, scoped, tag = 'internal scratch']
  %s0 = inlined_call_operand.hbm [shape: f32[16,128], index: 0, kind: input, shape index: {}]
  %s1 = inlined_call_operand.hbm [shape: f32[2,1,128], index: 1, kind: output, shape index: {}]
  %s2 = sld [smem:[#allocation0]]
  $region41: #{tpu_custom_call.1} parent=0
    _
  %s4 = ssub.s32 1, %s2
  %s5 = scalar_select 0, %s4, %s2
  $region1: #{tpu_custom_call.1} parent=0
    #allocation2 [shape = 'u8[8192]{0}', space=vmem, size = 0x2000, scoped, tag = 'input window, operand 0']
    #allocation3 [shape = 's32[2]{0}', space=sflag, size = 0x8, scoped, tag = 'scoped memory for tpu_custom_call.1']
    #allocation4 [shape = 's32[2]{0}', space=sflag, size = 0x8, scoped, tag = 'scoped memory for tpu_custom_call.1']
    #allocation5 [shape = 'u8[1024]{0}', space=vmem, size = 0x400, scoped, tag = 'output window, operand 0']
    %6 = vsyncpa [#allocation3], 0
    %s7 = scalar_lea.sflag [#allocation3], 1
    %8 = vsyncpa %s7, 0
    %9 = vsyncpa [#allocation4], 0
    %s10 = scalar_lea.sflag [#allocation4], 1
    %11 = vsyncpa %s10, 0
    loop: start=0, step=1, limit=4
    $region2: #{tpu_custom_call.1} parent=1 // loop_pre_header
      _
    $region3: #{tpu_custom_call.1} parent=1 // loop_header
      %s13 = sphi 0, %s17
      %p14 = scmp.ge.s32.totalorder %s13, 4
      %s23 = sphi 0, %s25
      %s26 = sphi 0, %s23
      %s27 = sphi 0, %s26
      %s43 = sphi 0, %s27
      %s49 = sphi 0, %s51
      %s52 = sphi 0, %s49
      %s53 = sphi 0, %s52
      %s69 = sphi 0, %s53
    $region4: #{tpu_custom_call.1} parent=1 // loop_header_branch
      %16 = sbr.rel (%p14) target = $region8
    $region5: #{tpu_custom_call.1} parent=1 // loop_body
      %s18 = ssub.s32 %s13, 1
      %s19 = ssub.s32 %s13, 2
      %s20 = sadd.s32 %s13, 1
      %s21 = ssub.s32 %s13, %s20
      %p22 = scmp.eq.s32.totalorder %s21, 0
      %s24 = sadd.s32 %s23, 1
      %s25 = scalar_select %p22, %s23, %s24
      %p28 = pneg %p22
      %p29 = scmp.eq.s32.totalorder %s13, 1
      %p30 = por %p28, %p29
      %p31 = scmp.ne.s32.totalorder %s23, %s26
      %p32 = scmp.eq.s32.totalorder %s13, 0
      %p33 = por %p31, %p32
      %p34 = scmp.ne.s32.totalorder %s23, %s26
      %p35 = scmp.eq.s32.totalorder %s18, 1
      %p36 = por %p34, %p35
      %p37 = scmp.ne.s32.totalorder %s26, %s27
      %p38 = scmp.eq.s32.totalorder %s18, 0
      %p39 = por %p37, %p38
      %p40 = scmp.ne.s32.totalorder %s26, %s27
      %p41 = scmp.eq.s32.totalorder %s19, 1
      %p42 = por %p40, %p41
      %p44 = scmp.ne.s32.totalorder %s27, %s43
      %p45 = scmp.eq.s32.totalorder %s19, 0
      %p46 = por %p44, %p45
      %s47 = ssub.s32 %s13, %s20
      %p48 = scmp.eq.s32.totalorder %s47, 0
      %s50 = sadd.s32 %s49, 1
      %s51 = scalar_select %p48, %s49, %s50
      %p54 = pneg %p48
      %p55 = scmp.eq.s32.totalorder %s13, 1
      %p56 = por %p54, %p55
      %p57 = scmp.ne.s32.totalorder %s49, %s52
      %p58 = scmp.eq.s32.totalorder %s13, 0
      %p59 = por %p57, %p58
      %p60 = scmp.ne.s32.totalorder %s49, %s52
      %p61 = scmp.eq.s32.totalorder %s18, 1
      %p62 = por %p60, %p61
      %p63 = scmp.ne.s32.totalorder %s52, %s53
      %p64 = scmp.eq.s32.totalorder %s18, 0
      %p65 = por %p63, %p64
      %p66 = scmp.ne.s32.totalorder %s52, %s53
      %p67 = scmp.eq.s32.totalorder %s19, 1
      %p68 = por %p66, %p67
      %p70 = scmp.ne.s32.totalorder %s53, %s69
      %p71 = scmp.eq.s32.totalorder %s19, 0
      %p72 = por %p70, %p71
      %p73 = scmp.le.s32.totalorder 1, %s13
      %p74 = scmp.lt.s32.totalorder %s13, 3
      %p75 = pnand %p73, %p74
      %p76 = pneg %p75
      // Predicated region
      $region9: #{tpu_custom_call.1} parent=5 // pred_check
        _
      $region10: #{tpu_custom_call.1} parent=5 // pred_check_branch
        %78 = sbr.rel (%p75) target = $region12
      $region11: #{tpu_custom_call.1} parent=5 // pred_region
        %s79 = ssub.s32 %s13, 1
      $region12: #{tpu_custom_call.1} parent=5 // pred_fallthru
        _
      %p80 = scmp.lt.s32.totalorder %s13, 2
      // Predicated region
      $region13: #{tpu_custom_call.1} parent=5 // pred_check
        %p81 = pneg %p80
      $region14: #{tpu_custom_call.1} parent=5 // pred_check_branch
        %83 = sbr.rel (%p81) target = $region16
      $region15: #{tpu_custom_call.1} parent=5 // pred_region
        // Predicated region
        $region17: #{tpu_custom_call.1} parent=15 // pred_check
          %p84 = pneg %p33
        $region18: #{tpu_custom_call.1} parent=15 // pred_check_branch
          %86 = sbr.rel (%p84) target = $region20
        $region19: #{tpu_custom_call.1} parent=15 // pred_region
          %s87 = sand.u32 %s23, 1
          %s88 = scalar_lea.sflag [#allocation3], %s87
          %s89 = sand.u32 %s23, 1
          %s90 = smul.addr %s89, 8
          %s91 = scalar_lea.vmem [#allocation2], %s90
          %93 = vsyncadd %s88, 0
          %s94 = smul.addr %s13, 8
          %s95 = scalar_lea.hbm %s0, %s94
          %s97 = sshll.u32 %s95, 4
          %s98 = int_to_ptr.hbm [resolvable:$true] %s97
          %s99 = sshll.u32 %s91, 4
          %s100 = int_to_ptr.vmem [resolvable:$true] %s99
          %102 = dma.hbm_to_vmem [thread:$0]  %s98, 128, %s100, %s88
        $region20: #{tpu_custom_call.1} parent=15 // pred_fallthru
          _
      $region16: #{tpu_custom_call.1} parent=5 // pred_fallthru
        _
      %p103 = scmp.le.s32.totalorder 1, %s13
      %p104 = scmp.lt.s32.totalorder %s13, 3
      %p105 = pnand %p103, %p104
      %p106 = pneg %p105
      // Predicated region
      $region21: #{tpu_custom_call.1} parent=5 // pred_check
        _
      $region22: #{tpu_custom_call.1} parent=5 // pred_check_branch
        %108 = sbr.rel (%p105) target = $region24
      $region23: #{tpu_custom_call.1} parent=5 // pred_region
        %s109 = ssub.s32 %s13, 1
        %s110 = sand.u32 %s26, 1
        %s111 = scalar_lea.sflag [#allocation3], %s110
        %s112 = sand.u32 %s26, 1
        %s113 = smul.addr %s112, 8
        %s114 = scalar_lea.vmem [#allocation2], %s113
        // Predicated region
        $region25: #{tpu_custom_call.1} parent=23 // pred_check
          %p115 = pneg %p39
        $region26: #{tpu_custom_call.1} parent=23 // pred_check_branch
          %117 = sbr.rel (%p115) target = $region28
        $region27: #{tpu_custom_call.1} parent=23 // pred_region
          %119 = dma.done %s111, 128
        $region28: #{tpu_custom_call.1} parent=23 // pred_fallthru
          _
        %s120 = sand.u32 %s26, 1
        %s121 = scalar_lea.sflag [#allocation3], %s120
        %s122 = sand.u32 %s26, 1
        %s123 = smul.addr %s122, 8
        %s124 = scalar_lea.vmem [#allocation2], %s123
        %p125 = pneg %p39
        %p126 = pneg %p36
        %p127 = pneg %p65
        %p128 = pneg %p62
        %s129 = sand.u32 %s52, 1
        %s130 = scalar_lea.sflag [#allocation4], %s129
        %s131 = sand.u32 %s52, 1
        %s132 = scalar_lea.vmem [#allocation5], %s131
        %v133 = vld [vmem:[%s114] sm:$0xff]
        %v134 = vlaneseq
        %v135 = vand.u32 %v134, 127
        %v136 = vlaneseq
        %v137 = vshrl.u32 %v136, 7
        %vm138 = vcmp.lt.s32.totalorder %v135, 0
        %v139 = vsub.s32 0, %v135
        %v140 = vsel %vm138, %v139, %v135
        %v141 = vshrl.u32 %v140, 4
        %v142 = vand.u32 %v140, 15
        %v143 = vsub.s32 0, %v142
        %v144 = vsel %vm138, %v143, %v142
        %vm145 = vcmp.ne.s32.totalorder %v144, 0
        %vm146 = vcmp.lt.s32.totalorder %v144, 0
        %vm147 = vmand %vm146, %vm145
        %v148 = vadd.s32 %v144, 16
        %v149 = vsel %vm147, %v148, %v144
        %vm150 = vcmp.ne.s32.totalorder %v149, 15
        %151 = vrot.lane.b32.xlu0 %v133, 127
        %v152 = vpop.permute.xlu0 %151
        %v153 = vsub.f32 %v133, %v152
        %v154 = vand.u32 2147483647, %v153
        %v155 = vsel %vm150, 1, 0
        %vm156 = vcmp.eq.s32.totalorder %v155, 1
        %v157 = vsel %vm156, %v154, 0.0
        %vm158 = vcmp.lt.s32.totalorder %v135, 112
        %159 = vrot.lane.b32.xlu0 %v133, 112
        %v160 = vpop.permute.xlu0 %159
        %v161 = vrot.slane %v160, 1
        %v162 = vsel %vm158, 1, 0
        %vm163 = vcmp.eq.s32.totalorder %v162, 1
        %v164 = vsel %vm163, %v160, %v161
        %vm165 = vcmp.lt.s32.totalorder %v137, 0
        %v166 = vsub.s32 0, %v137
        %v167 = vsel %vm165, %v166, %v137
        %v168 = vshrl.u32 %v167, 1
        %v169 = vand.u32 %v167, 1
        %v170 = vsub.s32 0, %v169
        %v171 = vsel %vm165, %v170, %v169
        %vm172 = vcmp.ne.s32.totalorder %v171, 0
        %vm173 = vcmp.lt.s32.totalorder %v171, 0
        %vm174 = vmand %vm173, %vm172
        %v175 = vadd.s32 %v171, 2
        %v176 = vsel %vm174, %v175, %v171
        %vm177 = vcmp.ne.s32.totalorder %v176, 1
        %v178 = vsel %vm177, 1, 0
        %vm179 = vcmp.eq.s32.totalorder %v178, 1
        %vm180 = vmor %vm179, %vm163
        %v181 = vsub.f32 %v133, %v164
        %v182 = vand.u32 2147483647, %v181
        %v183 = vsel %vm180, %v182, 0.0
        %v184 = vadd.f32 %v157, %v183
        %v185 = vrot.slane %v184, 4
        %v186 = vadd.f32 %v184, %v185
        %v187 = vrot.slane %v186, 2
        %v188 = vadd.f32 %v186, %v187
        %v189 = vrot.slane %v188, 1
        %v190 = vadd.f32 %v188, %v189
        %191 = vst [vmem:[%s132] sm:$0x1] %v190
        %s192 = sand.u32 %s52, 1
        %s193 = scalar_lea.sflag [#allocation4], %s192
        %s194 = sand.u32 %s52, 1
        %s195 = scalar_lea.vmem [#allocation5], %s194
        // Predicated region
        $region29: #{tpu_custom_call.1} parent=23 // pred_check
          %p196 = pneg %p62
        $region30: #{tpu_custom_call.1} parent=23 // pred_check_branch
          %198 = sbr.rel (%p196) target = $region32
        $region31: #{tpu_custom_call.1} parent=23 // pred_region
          %200 = vsyncadd %s193, 0
          %s201 = scalar_lea.hbm %s1, %s18
          %s203 = sshll.u32 %s195, 4
          %s204 = int_to_ptr.vmem [resolvable:$true] %s203
          %s205 = sshll.u32 %s201, 4
          %s206 = int_to_ptr.hbm [resolvable:$true] %s205
          %208 = dma.vmem_to_hbm [thread:$0]  %s204, 16, %s206, %s193
        $region32: #{tpu_custom_call.1} parent=23 // pred_fallthru
          _
      $region24: #{tpu_custom_call.1} parent=5 // pred_fallthru
        _
      %p209 = scmp.le.s32.totalorder 2, %s13
      // Predicated region
      $region33: #{tpu_custom_call.1} parent=5 // pred_check
        %p210 = pneg %p209
      $region34: #{tpu_custom_call.1} parent=5 // pred_check_branch
        %212 = sbr.rel (%p210) target = $region36
      $region35: #{tpu_custom_call.1} parent=5 // pred_region
        %s213 = ssub.s32 %s13, 2
        // Predicated region
        $region37: #{tpu_custom_call.1} parent=35 // pred_check
          %p214 = pneg %p68
        $region38: #{tpu_custom_call.1} parent=35 // pred_check_branch
          %216 = sbr.rel (%p214) target = $region40
        $region39: #{tpu_custom_call.1} parent=35 // pred_region
          %s217 = sand.u32 %s53, 1
          %s218 = scalar_lea.sflag [#allocation4], %s217
          %s219 = sand.u32 %s53, 1
          %s220 = scalar_lea.vmem [#allocation5], %s219
          %222 = dma.done %s218, 16
        $region40: #{tpu_custom_call.1} parent=35 // pred_fallthru
          _
      $region36: #{tpu_custom_call.1} parent=5 // pred_fallthru
        _
    $region6: #{tpu_custom_call.1} parent=1 // loop_footer
      %s17 = sadd.s32 1, %s13
    $region7: #{tpu_custom_call.1} parent=1 // loop_footer_branch
      %12 = sbr.rel target = $region3
    $region8: #{tpu_custom_call.1} parent=1 // loop_exit
      _
    %223 = vsyncpa [#allocation3], 1
    %s224 = scalar_lea.sflag [#allocation3], 1
    %225 = vsyncpa %s224, 1
    %226 = vsyncpa [#allocation4], 1
    %s227 = scalar_lea.sflag [#allocation4], 1
    %228 = vsyncpa %s227, 1

</llo_original>
